<compile_context>
chip_gen: v7x
topology: tpu7x:2x2x1
jax: 0.10.0
libtpu: 0.0.40
codegen_flags: <defaults>
</compile_context>

<pallas_src>
import numpy as np
import jax
import jax.numpy as jnp
from jax.experimental import pallas as pl
from jax.experimental.pallas import tpu as pltpu


_ROW_CHUNK = 8                          # sublane-aligned group of field rows per step
_VMEM_BUDGET = 12 * 1024 * 1024         # stay well under default scoped-VMEM limits
_SEL_RESIDENT_BUDGET = 5 * 1024 * 1024  # 2x selector bytes allowed for resident mode


def _round_up(a, b):
    return ((a + b - 1) // b) * b


def _make_qoi_kernel(sel_resident, n_row, single_chunk):
    def kernel(chunk_ref, x_ref, s_ref, o_ref, acc_ref):
        # chunk_ref: (C,) int32 SMEM (scalar prefetch; consumed by index_maps only)
        # x_ref:     (TM, ROW_CHUNK, W)                sampled row-chunk of the field
        # s_ref:     (C or 1, ROW_CHUNK, W, PPAD)      static one-hot selector
        # o_ref:     (TM, PPAD)                        sampled values (lane-dense)
        # acc_ref:   (TM, PPAD) f32, resident across the chunk axis
        del chunk_ref
        c = pl.program_id(1)
        sel_c = c if sel_resident else 0

        part = jnp.dot(x_ref[:, 0, :], s_ref[sel_c, 0],
                       preferred_element_type=jnp.float32)
        for j in range(1, n_row):
            part += jnp.dot(x_ref[:, j, :], s_ref[sel_c, j],
                            preferred_element_type=jnp.float32)

        if single_chunk:
            o_ref[...] = part.astype(o_ref.dtype)
        else:
            @pl.when(c == 0)
            def _init():
                acc_ref[...] = jnp.zeros_like(acc_ref)

            acc_ref[...] += part

            @pl.when(c == pl.num_programs(1) - 1)
            def _finalize():
                o_ref[...] = acc_ref[...].astype(o_ref.dtype)

    return kernel


def qoi_sampling_2d(x, sample_points):
    """Pallas implementation of QoISampling2d.forward.

    x: array with shape (..., H, W)  (e.g. NCHW)
    sample_points: (P, 2) numpy array with entries in (0, 1)
    returns: array with shape (..., P)
    """
    sp = np.asarray(sample_points)
    assert sp.ndim == 2 and sp.shape[1] == 2
    assert np.all(0 < sp) and np.all(sp < 1)

    H, W = int(x.shape[-2]), int(x.shape[-1])
    idxs = np.floor(np.asarray([H, W]) * sp).astype(np.int64)  # static, module-exact
    rows, cols = idxs[:, 0], idxs[:, 1]
    P = int(rows.shape[0])

    batch_shape = x.shape[:-2]
    M = int(np.prod(batch_shape)) if batch_shape else 1

    orig_dtype = x.dtype
    cdtype = jnp.bfloat16 if x.dtype == jnp.bfloat16 else jnp.float32
    itemsize = np.dtype(cdtype).itemsize

    TH = _ROW_CHUNK
    PPAD = _round_up(max(P, 1), 128)          # lane-dense output / MXU N dim
    H_pad = _round_up(H, TH)

    # ---- static selector construction (host side) ----
    chunk_of_sample = rows // TH
    uniq_chunks = np.unique(chunk_of_sample)  # sorted unique 8-row chunks
    C = int(uniq_chunks.shape[0])
    chunk_pos = {int(ch): k for k, ch in enumerate(uniq_chunks)}

    sel_np = np.zeros((C, TH, W, PPAD), dtype=np.float32)
    for p in range(P):
        sel_np[chunk_pos[int(chunk_of_sample[p])],
               int(rows[p] % TH), int(cols[p]), p] = 1.0
    sel = jnp.asarray(sel_np, dtype=cdtype)
    chunk_idx = jnp.asarray(uniq_chunks, dtype=jnp.int32)

    sel_bytes = C * TH * W * PPAD * itemsize
    sel_resident = (2 * sel_bytes) <= _SEL_RESIDENT_BUDGET

    # ---- tile sizing (keep per-step footprint well under scoped VMEM) ----
    SUB = 16 if cdtype == jnp.bfloat16 else 8

    def vmem_footprint(tm):
        x_blk = tm * TH * W * itemsize
        o_blk = tm * PPAD * itemsize
        s_blk = sel_bytes if sel_resident else TH * W * PPAD * itemsize
        acc = tm * PPAD * 4
        return 2 * (x_blk + o_blk + s_blk) + acc

    TM = 1024
    m_cap = _round_up(M, SUB)
    while TM > SUB and (TM > m_cap or vmem_footprint(TM) > _VMEM_BUDGET):
        TM //= 2
    TM = max(TM, SUB)

    # ---- prepare input: flatten batch; zero-pad H only if a partial chunk exists ----
    xk = x.reshape(M, H, W).astype(cdtype)
    if H_pad != H:
        xk = jnp.pad(xk, ((0, 0), (0, H_pad - H), (0, 0)))
    # No M padding: grid uses cdiv and Pallas masks the partial last batch block.

    grid = (pl.cdiv(M, TM), C)

    if sel_resident:
        sel_spec = pl.BlockSpec((C, TH, W, PPAD), lambda i, c, chunks: (0, 0, 0, 0))
    else:
        sel_spec = pl.BlockSpec((1, TH, W, PPAD), lambda i, c, chunks: (c, 0, 0, 0))

    kernel = _make_qoi_kernel(sel_resident, TH, C == 1)

    out = pl.pallas_call(
        kernel,
        out_shape=jax.ShapeDtypeStruct((M, PPAD), cdtype),
        grid_spec=pltpu.PrefetchScalarGridSpec(
            num_scalar_prefetch=1,
            grid=grid,
            in_specs=[
                # field: only the 8-row chunk containing sampled rows
                pl.BlockSpec((TM, TH, W), lambda i, c, chunks: (i, chunks[c], 0)),
                # precomputed one-hot selector (VMEM-resident or streamed per chunk)
                sel_spec,
            ],
            out_specs=pl.BlockSpec((TM, PPAD), lambda i, c, chunks: (i, 0)),
            scratch_shapes=[pltpu.VMEM((TM, PPAD), jnp.float32)],
        ),
        compiler_params=pltpu.CompilerParams(
            dimension_semantics=("parallel", "arbitrary"),
        ),
    )(chunk_idx, xk, sel)

    out = out[:, :P].astype(orig_dtype)
    return out.reshape(*batch_shape, P)


if __name__ == "__main__":
    # Deterministic "module parameters": P = 8 sample points in (0, 1)^2.
    P = 8
    sample_points = np.stack(
        [
            np.linspace(0.07, 0.93, P),
            np.linspace(0.11, 0.89, P)[::-1].copy(),
        ],
        axis=1,
    )  # (P, 2), strictly inside (0, 1)

    # Small deterministic input, NCHW.
    key = jax.random.PRNGKey(0)
    x = jax.random.normal(key, (2, 4, 16, 16), dtype=jnp.float32)

    out = qoi_sampling_2d(x, sample_points)
    out = jax.block_until_ready(out)

    # Pure-JAX reference matching the PyTorch advanced-indexing semantics.
    Nsp = np.asarray(x.shape[-2:])
    idxs = np.floor(Nsp * sample_points).astype(int)             # (P, 2)
    ref = x[..., idxs[:, 0], idxs[:, 1]]                         # (2, 4, P)

    assert out.shape == ref.shape, (out.shape, ref.shape)
    np.testing.assert_allclose(np.asarray(out), np.asarray(ref), rtol=0, atol=0)
    print("KERNEL_OK")
</pallas_src>

<mosaic_0001>
module attributes {stable_mosaic.version = 11 : i64} {
  func.func @kernel(%arg0: i32, %arg1: i32, %arg2: memref<2xi32, #tpu.memory_space<smem>>, %arg3: memref<8x8x16xf32, #tpu.memory_space<vmem>>, %arg4: memref<2x8x16x128xf32, #tpu.memory_space<vmem>>, %arg5: memref<8x128xf32, #tpu.memory_space<vmem>>, %arg6: memref<8x128xf32, #tpu.memory_space<vmem>>) attributes {dimension_semantics = [#tpu.dimension_semantics<parallel>, #tpu.dimension_semantics<arbitrary>], iteration_bounds = array<i64: 1, 2>, scalar_prefetch = 1 : i64, scratch_operands = 1 : i64, tpu.core_type = #tpu.core_type<tc>, window_params = [{transform_indices = @transform_0, window_bounds = array<i64: 8, 8, 16>}, {pipeline_mode = #tpu.pipeline_mode<synchronous>, transform_indices = @transform_1, window_bounds = array<i64: 2, 8, 16, 128>}, {transform_indices = @transform_2, window_bounds = array<i64: 8, 128>}]} {
    %c0 = arith.constant 0 : index
    %c0_0 = arith.constant 0 : index
    %c0_1 = arith.constant 0 : index
    %0 = vector.load %arg3[%c0, %c0_0, %c0_1] : memref<8x8x16xf32, #tpu.memory_space<vmem>>, vector<8x1x16xf32>
    %1 = vector.shape_cast %0 : vector<8x1x16xf32> to vector<8x16xf32>
    %2 = arith.index_cast %arg1 : i32 to index
    %c0_2 = arith.constant 0 : index
    %c0_3 = arith.constant 0 : index
    %c0_4 = arith.constant 0 : index
    %3 = vector.load %arg4[%2, %c0_2, %c0_3, %c0_4] : memref<2x8x16x128xf32, #tpu.memory_space<vmem>>, vector<1x1x16x128xf32>
    %4 = vector.shape_cast %3 : vector<1x1x16x128xf32> to vector<16x128xf32>
    %cst = arith.constant dense<0.000000e+00> : vector<8x128xf32>
    %5 = tpu.matmul %1, %4, %cst {dimension_numbers = #tpu.dot_dimension_numbers<[1], [0], [0], [1], [0, 0, 1, 1], [], []>} : vector<8x16xf32>, vector<16x128xf32>, vector<8x128xf32> -> vector<8x128xf32>
    %c0_5 = arith.constant 0 : index
    %c1 = arith.constant 1 : index
    %c0_6 = arith.constant 0 : index
    %6 = vector.load %arg3[%c0_5, %c1, %c0_6] : memref<8x8x16xf32, #tpu.memory_space<vmem>>, vector<8x1x16xf32>
    %7 = vector.shape_cast %6 : vector<8x1x16xf32> to vector<8x16xf32>
    %8 = arith.index_cast %arg1 : i32 to index
    %c1_7 = arith.constant 1 : index
    %c0_8 = arith.constant 0 : index
    %c0_9 = arith.constant 0 : index
    %9 = vector.load %arg4[%8, %c1_7, %c0_8, %c0_9] : memref<2x8x16x128xf32, #tpu.memory_space<vmem>>, vector<1x1x16x128xf32>
    %10 = vector.shape_cast %9 : vector<1x1x16x128xf32> to vector<16x128xf32>
    %cst_10 = arith.constant dense<0.000000e+00> : vector<8x128xf32>
    %11 = tpu.matmul %7, %10, %cst_10 {dimension_numbers = #tpu.dot_dimension_numbers<[1], [0], [0], [1], [0, 0, 1, 1], [], []>} : vector<8x16xf32>, vector<16x128xf32>, vector<8x128xf32> -> vector<8x128xf32>
    %12 = arith.addf %5, %11 : vector<8x128xf32>
    %c0_11 = arith.constant 0 : index
    %c2 = arith.constant 2 : index
    %c0_12 = arith.constant 0 : index
    %13 = vector.load %arg3[%c0_11, %c2, %c0_12] : memref<8x8x16xf32, #tpu.memory_space<vmem>>, vector<8x1x16xf32>
    %14 = vector.shape_cast %13 : vector<8x1x16xf32> to vector<8x16xf32>
    %15 = arith.index_cast %arg1 : i32 to index
    %c2_13 = arith.constant 2 : index
    %c0_14 = arith.constant 0 : index
    %c0_15 = arith.constant 0 : index
    %16 = vector.load %arg4[%15, %c2_13, %c0_14, %c0_15] : memref<2x8x16x128xf32, #tpu.memory_space<vmem>>, vector<1x1x16x128xf32>
    %17 = vector.shape_cast %16 : vector<1x1x16x128xf32> to vector<16x128xf32>
    %cst_16 = arith.constant dense<0.000000e+00> : vector<8x128xf32>
    %18 = tpu.matmul %14, %17, %cst_16 {dimension_numbers = #tpu.dot_dimension_numbers<[1], [0], [0], [1], [0, 0, 1, 1], [], []>} : vector<8x16xf32>, vector<16x128xf32>, vector<8x128xf32> -> vector<8x128xf32>
    %19 = arith.addf %12, %18 : vector<8x128xf32>
    %c0_17 = arith.constant 0 : index
    %c3 = arith.constant 3 : index
    %c0_18 = arith.constant 0 : index
    %20 = vector.load %arg3[%c0_17, %c3, %c0_18] : memref<8x8x16xf32, #tpu.memory_space<vmem>>, vector<8x1x16xf32>
    %21 = vector.shape_cast %20 : vector<8x1x16xf32> to vector<8x16xf32>
    %22 = arith.index_cast %arg1 : i32 to index
    %c3_19 = arith.constant 3 : index
    %c0_20 = arith.constant 0 : index
    %c0_21 = arith.constant 0 : index
    %23 = vector.load %arg4[%22, %c3_19, %c0_20, %c0_21] : memref<2x8x16x128xf32, #tpu.memory_space<vmem>>, vector<1x1x16x128xf32>
    %24 = vector.shape_cast %23 : vector<1x1x16x128xf32> to vector<16x128xf32>
    %cst_22 = arith.constant dense<0.000000e+00> : vector<8x128xf32>
    %25 = tpu.matmul %21, %24, %cst_22 {dimension_numbers = #tpu.dot_dimension_numbers<[1], [0], [0], [1], [0, 0, 1, 1], [], []>} : vector<8x16xf32>, vector<16x128xf32>, vector<8x128xf32> -> vector<8x128xf32>
    %26 = arith.addf %19, %25 : vector<8x128xf32>
    %c0_23 = arith.constant 0 : index
    %c4 = arith.constant 4 : index
    %c0_24 = arith.constant 0 : index
    %27 = vector.load %arg3[%c0_23, %c4, %c0_24] : memref<8x8x16xf32, #tpu.memory_space<vmem>>, vector<8x1x16xf32>
    %28 = vector.shape_cast %27 : vector<8x1x16xf32> to vector<8x16xf32>
    %29 = arith.index_cast %arg1 : i32 to index
    %c4_25 = arith.constant 4 : index
    %c0_26 = arith.constant 0 : index
    %c0_27 = arith.constant 0 : index
    %30 = vector.load %arg4[%29, %c4_25, %c0_26, %c0_27] : memref<2x8x16x128xf32, #tpu.memory_space<vmem>>, vector<1x1x16x128xf32>
    %31 = vector.shape_cast %30 : vector<1x1x16x128xf32> to vector<16x128xf32>
    %cst_28 = arith.constant dense<0.000000e+00> : vector<8x128xf32>
    %32 = tpu.matmul %28, %31, %cst_28 {dimension_numbers = #tpu.dot_dimension_numbers<[1], [0], [0], [1], [0, 0, 1, 1], [], []>} : vector<8x16xf32>, vector<16x128xf32>, vector<8x128xf32> -> vector<8x128xf32>
    %33 = arith.addf %26, %32 : vector<8x128xf32>
    %c0_29 = arith.constant 0 : index
    %c5 = arith.constant 5 : index
    %c0_30 = arith.constant 0 : index
    %34 = vector.load %arg3[%c0_29, %c5, %c0_30] : memref<8x8x16xf32, #tpu.memory_space<vmem>>, vector<8x1x16xf32>
    %35 = vector.shape_cast %34 : vector<8x1x16xf32> to vector<8x16xf32>
    %36 = arith.index_cast %arg1 : i32 to index
    %c5_31 = arith.constant 5 : index
    %c0_32 = arith.constant 0 : index
    %c0_33 = arith.constant 0 : index
    %37 = vector.load %arg4[%36, %c5_31, %c0_32, %c0_33] : memref<2x8x16x128xf32, #tpu.memory_space<vmem>>, vector<1x1x16x128xf32>
    %38 = vector.shape_cast %37 : vector<1x1x16x128xf32> to vector<16x128xf32>
    %cst_34 = arith.constant dense<0.000000e+00> : vector<8x128xf32>
    %39 = tpu.matmul %35, %38, %cst_34 {dimension_numbers = #tpu.dot_dimension_numbers<[1], [0], [0], [1], [0, 0, 1, 1], [], []>} : vector<8x16xf32>, vector<16x128xf32>, vector<8x128xf32> -> vector<8x128xf32>
    %40 = arith.addf %33, %39 : vector<8x128xf32>
    %c0_35 = arith.constant 0 : index
    %c6 = arith.constant 6 : index
    %c0_36 = arith.constant 0 : index
    %41 = vector.load %arg3[%c0_35, %c6, %c0_36] : memref<8x8x16xf32, #tpu.memory_space<vmem>>, vector<8x1x16xf32>
    %42 = vector.shape_cast %41 : vector<8x1x16xf32> to vector<8x16xf32>
    %43 = arith.index_cast %arg1 : i32 to index
    %c6_37 = arith.constant 6 : index
    %c0_38 = arith.constant 0 : index
    %c0_39 = arith.constant 0 : index
    %44 = vector.load %arg4[%43, %c6_37, %c0_38, %c0_39] : memref<2x8x16x128xf32, #tpu.memory_space<vmem>>, vector<1x1x16x128xf32>
    %45 = vector.shape_cast %44 : vector<1x1x16x128xf32> to vector<16x128xf32>
    %cst_40 = arith.constant dense<0.000000e+00> : vector<8x128xf32>
    %46 = tpu.matmul %42, %45, %cst_40 {dimension_numbers = #tpu.dot_dimension_numbers<[1], [0], [0], [1], [0, 0, 1, 1], [], []>} : vector<8x16xf32>, vector<16x128xf32>, vector<8x128xf32> -> vector<8x128xf32>
    %47 = arith.addf %40, %46 : vector<8x128xf32>
    %c0_41 = arith.constant 0 : index
    %c7 = arith.constant 7 : index
    %c0_42 = arith.constant 0 : index
    %48 = vector.load %arg3[%c0_41, %c7, %c0_42] : memref<8x8x16xf32, #tpu.memory_space<vmem>>, vector<8x1x16xf32>
    %49 = vector.shape_cast %48 : vector<8x1x16xf32> to vector<8x16xf32>
    %50 = arith.index_cast %arg1 : i32 to index
    %c7_43 = arith.constant 7 : index
    %c0_44 = arith.constant 0 : index
    %c0_45 = arith.constant 0 : index
    %51 = vector.load %arg4[%50, %c7_43, %c0_44, %c0_45] : memref<2x8x16x128xf32, #tpu.memory_space<vmem>>, vector<1x1x16x128xf32>
    %52 = vector.shape_cast %51 : vector<1x1x16x128xf32> to vector<16x128xf32>
    %cst_46 = arith.constant dense<0.000000e+00> : vector<8x128xf32>
    %53 = tpu.matmul %49, %52, %cst_46 {dimension_numbers = #tpu.dot_dimension_numbers<[1], [0], [0], [1], [0, 0, 1, 1], [], []>} : vector<8x16xf32>, vector<16x128xf32>, vector<8x128xf32> -> vector<8x128xf32>
    %54 = arith.addf %47, %53 : vector<8x128xf32>
    %c0_i32 = arith.constant 0 : i32
    %55 = arith.cmpi eq, %arg1, %c0_i32 : i32
    %56 = arith.extui %55 : i1 to i32
    %c0_i32_47 = arith.constant 0 : i32
    %57 = arith.cmpi ne, %56, %c0_i32_47 : i32
    scf.if %57 {
      %cst_53 = arith.constant 0.000000e+00 : f32
      %64 = vector.broadcast %cst_53 : f32 to vector<8x128xf32>
      %c0_54 = arith.constant 0 : index
      %c0_55 = arith.constant 0 : index
      %65 = vector.load %arg6[%c0_54, %c0_55] : memref<8x128xf32, #tpu.memory_space<vmem>>, vector<8x128xf32>
      tpu.vector_store %arg6[%c0_54, %c0_55], %64 {strides = array<i32>} : memref<8x128xf32, #tpu.memory_space<vmem>>, vector<8x128xf32>,
    } else {
    }
    %c0_48 = arith.constant 0 : index
    %c0_49 = arith.constant 0 : index
    %58 = vector.load %arg6[%c0_48, %c0_49] : memref<8x128xf32, #tpu.memory_space<vmem>>, vector<8x128xf32>
    %59 = arith.addf %58, %54 : vector<8x128xf32>
    %c0_50 = arith.constant 0 : index
    %c0_51 = arith.constant 0 : index
    %60 = vector.load %arg6[%c0_50, %c0_51] : memref<8x128xf32, #tpu.memory_space<vmem>>, vector<8x128xf32>
    tpu.vector_store %arg6[%c0_50, %c0_51], %59 {strides = array<i32>} : memref<8x128xf32, #tpu.memory_space<vmem>>, vector<8x128xf32>,
    %c1_i32 = arith.constant 1 : i32
    %61 = arith.cmpi eq, %arg1, %c1_i32 : i32
    %62 = arith.extui %61 : i1 to i32
    %c0_i32_52 = arith.constant 0 : i32
    %63 = arith.cmpi ne, %62, %c0_i32_52 : i32
    scf.if %63 {
      %c0_53 = arith.constant 0 : index
      %c0_54 = arith.constant 0 : index
      %64 = vector.load %arg6[%c0_53, %c0_54] : memref<8x128xf32, #tpu.memory_space<vmem>>, vector<8x128xf32>
      %c0_55 = arith.constant 0 : index
      %c0_56 = arith.constant 0 : index
      %65 = vector.load %arg5[%c0_55, %c0_56] : memref<8x128xf32, #tpu.memory_space<vmem>>, vector<8x128xf32>
      tpu.vector_store %arg5[%c0_55, %c0_56], %64 {strides = array<i32>} : memref<8x128xf32, #tpu.memory_space<vmem>>, vector<8x128xf32>,
    } else {
    }
    return
  }
  func.func @transform_0(%arg0: i32, %arg1: i32, %arg2: memref<2xi32, #tpu.memory_space<smem>>) -> (i32, i32, i32) {
    %0 = arith.index_cast %arg1 : i32 to index
    %1 = memref.load %arg2[%0] : memref<2xi32, #tpu.memory_space<smem>>
    %c0_i32 = arith.constant 0 : i32
    %c0_i32_0 = arith.constant 0 : i32
    return %arg0, %1, %c0_i32 : i32, i32, i32
  }
  func.func @transform_1(%arg0: i32, %arg1: i32, %arg2: memref<2xi32, #tpu.memory_space<smem>>) -> (i32, i32, i32, i32) {
    %c0_i32 = arith.constant 0 : i32
    %c0_i32_0 = arith.constant 0 : i32
    %c0_i32_1 = arith.constant 0 : i32
    %c0_i32_2 = arith.constant 0 : i32
    %c0_i32_3 = arith.constant 0 : i32
    return %c0_i32, %c0_i32_0, %c0_i32_1, %c0_i32_2 : i32, i32, i32, i32
  }
  func.func @transform_2(%arg0: i32, %arg1: i32, %arg2: memref<2xi32, #tpu.memory_space<smem>>) -> (i32, i32) {
    %c0_i32 = arith.constant 0 : i32
    %c0_i32_0 = arith.constant 0 : i32
    return %arg0, %c0_i32 : i32, i32
  }
}

</mosaic_0001>

<llo_original>
// kernel: tpu_custom_call.1
$region0: #{tpu_custom_call.1}
  #allocation0 [shape = 'u32[]', space=smem, size = 0x4, offset = 0x4, fixed_abs, tag = 'smem constant byte address 0x4 - core index']
  #allocation1 [shape = 'u32[144,128]{1,0:T(1,128)}', space=vmem, size = 0x12000, scoped, tag = 'internal scratch']
  #allocation2 [shape = 'f32[8,128]{1,0:T(8,128)}', space=vmem, size = 0x1000, scoped, tag = 'scratch operand']
  #allocation3 [shape = 's32[1]{0}', space=sflag, size = 0x4, scoped, tag = 'scoped memory for tpu_custom_call.1']
  #allocation4 [shape = 'u8[512]{0}', space=smem, size = 0x200, scoped, tag = 'prefetched SMEM operand 0']
  %s0 = inlined_call_operand.hbm [shape: s32[2], index: 0, kind: input, shape index: {}]
  %s1 = inlined_call_operand.hbm [shape: f32[8,16,16], index: 1, kind: input, shape index: {}]
  %s2 = inlined_call_operand.hbm [shape: f32[2,8,16,128], index: 2, kind: input, shape index: {}]
  %s3 = inlined_call_operand.hbm [shape: f32[8,128], index: 3, kind: output, shape index: {}]
  %s4 = sld [smem:[#allocation0]]
  $region57: #{tpu_custom_call.1} parent=0
    _
  %s6 = ssub.s32 1, %s4
  %s7 = scalar_select 0, %s6, %s4
  %9 = dma.hbm_to_smem %s0, 16, [#allocation4], [#allocation3]
  %10 = dma.done [#allocation3], 16
  %11 = sfence
  $region1: #{tpu_custom_call.1} parent=0
    #allocation5 [shape = 'u8[65536]{0}', space=vmem, size = 0x10000, scoped, tag = 'input window, operand 1']
    #allocation6 [shape = 's32[2]{0}', space=sflag, size = 0x8, scoped, tag = 'scoped memory for tpu_custom_call.1']
    #allocation7 [shape = 's32[2]{0}', space=sflag, size = 0x8, scoped, tag = 'scoped memory for tpu_custom_call.1']
    #allocation8 [shape = 'u8[131072]{0}', space=vmem, size = 0x20000, scoped, tag = 'input window, operand 2, single buffered']
    #allocation9 [shape = 's32[1]{0}', space=sflag, size = 0x4, scoped, tag = 'scoped memory for tpu_custom_call.1']
    #allocation10 [shape = 'u8[4096]{0}', space=vmem, size = 0x1000, scoped, tag = 'output window, operand 0, single buffered']
    %12 = vsyncpa [#allocation6], 0
    %s13 = scalar_lea.sflag [#allocation6], 1
    %14 = vsyncpa %s13, 0
    %15 = vsyncpa [#allocation9], 0
    %16 = vsyncpa [#allocation7], 0
    loop: start=0, step=1, limit=4
    $region2: #{tpu_custom_call.1} parent=1 // loop_pre_header
      _
    $region3: #{tpu_custom_call.1} parent=1 // loop_header
      %s18 = sphi 0, %s22
      %p19 = scmp.ge.s32.totalorder %s18, 4
      %s25 = sphi 0, %s37
      %s26 = sphi 0, %s33
      %s27 = sphi 0, %s25
      %s28 = sphi 0, %s26
      %s29 = sphi 0, %s27
      %s30 = sphi 0, %s28
      %s44 = sphi 0, %s46
      %s47 = sphi 0, %s44
      %s48 = sphi 0, %s47
      %s64 = sphi 0, %s48
      %s68 = sphi 0, %s68
      %s70 = sphi 0, %s68
      %s71 = sphi 0, %s70
      %s85 = sphi 0, %s71
      %s91 = sphi 0, %s93
      %s94 = sphi 0, %s91
      %s95 = sphi 0, %s94
      %s111 = sphi 0, %s95
    $region4: #{tpu_custom_call.1} parent=1 // loop_header_branch
      %21 = sbr.rel (%p19) target = $region8
    $region5: #{tpu_custom_call.1} parent=1 // loop_body
      %s23 = ssub.s32 %s18, 1
      %s24 = ssub.s32 %s18, 2
      %s31 = sadd.s32 1, %s26
      %p32 = scmp.ge.s32.totalorder %s31, 2
      %s33 = scalar_select %p32, 0, %s31
      %s34 = sadd.s32 1, %s25
      %s35 = scalar_select %p32, %s34, %s25
      %p36 = scmp.ge.s32.totalorder %s35, 1
      %s37 = scalar_select %p36, 0, %s35
      %s38 = sld [smem:[#allocation4 + %s26]]
      %s39 = sld [smem:[#allocation4 + %s33]]
      %s40 = ssub.s32 %s25, %s37
      %s41 = ssub.s32 %s38, %s39
      %s42 = sor.u32 %s40, %s41
      %p43 = scmp.eq.s32.totalorder %s42, 0
      %s45 = sadd.s32 %s44, 1
      %s46 = scalar_select %p43, %s44, %s45
      %p49 = pneg %p43
      %p50 = scmp.eq.s32.totalorder %s18, 1
      %p51 = por %p49, %p50
      %p52 = scmp.ne.s32.totalorder %s44, %s47
      %p53 = scmp.eq.s32.totalorder %s18, 0
      %p54 = por %p52, %p53
      %p55 = scmp.ne.s32.totalorder %s44, %s47
      %p56 = scmp.eq.s32.totalorder %s23, 1
      %p57 = por %p55, %p56
      %p58 = scmp.ne.s32.totalorder %s47, %s48
      %p59 = scmp.eq.s32.totalorder %s23, 0
      %p60 = por %p58, %p59
      %p61 = scmp.ne.s32.totalorder %s47, %s48
      %p62 = scmp.eq.s32.totalorder %s24, 1
      %p63 = por %p61, %p62
      %p65 = scmp.ne.s32.totalorder %s48, %s64
      %p66 = scmp.eq.s32.totalorder %s24, 0
      %p67 = por %p65, %p66
      %s69 = sadd.s32 %s68, 1
      %p72 = scmp.eq.s32.totalorder %s18, 1
      %p73 = scmp.ne.s32.totalorder %s68, %s70
      %p74 = scmp.eq.s32.totalorder %s18, 0
      %p75 = por %p73, %p74
      %p76 = scmp.ne.s32.totalorder %s68, %s70
      %p77 = scmp.eq.s32.totalorder %s23, 1
      %p78 = por %p76, %p77
      %p79 = scmp.ne.s32.totalorder %s70, %s71
      %p80 = scmp.eq.s32.totalorder %s23, 0
      %p81 = por %p79, %p80
      %p82 = scmp.ne.s32.totalorder %s70, %s71
      %p83 = scmp.eq.s32.totalorder %s24, 1
      %p84 = por %p82, %p83
      %p86 = scmp.ne.s32.totalorder %s71, %s85
      %p87 = scmp.eq.s32.totalorder %s24, 0
      %p88 = por %p86, %p87
      %s89 = ssub.s32 %s25, %s37
      %p90 = scmp.eq.s32.totalorder %s89, 0
      %s92 = sadd.s32 %s91, 1
      %s93 = scalar_select %p90, %s91, %s92
      %p96 = pneg %p90
      %p97 = scmp.eq.s32.totalorder %s18, 1
      %p98 = por %p96, %p97
      %p99 = scmp.ne.s32.totalorder %s91, %s94
      %p100 = scmp.eq.s32.totalorder %s18, 0
      %p101 = por %p99, %p100
      %p102 = scmp.ne.s32.totalorder %s91, %s94
      %p103 = scmp.eq.s32.totalorder %s23, 1
      %p104 = por %p102, %p103
      %p105 = scmp.ne.s32.totalorder %s94, %s95
      %p106 = scmp.eq.s32.totalorder %s23, 0
      %p107 = por %p105, %p106
      %p108 = scmp.ne.s32.totalorder %s94, %s95
      %p109 = scmp.eq.s32.totalorder %s24, 1
      %p110 = por %p108, %p109
      %p112 = scmp.ne.s32.totalorder %s95, %s111
      %p113 = scmp.eq.s32.totalorder %s24, 0
      %p114 = por %p112, %p113
      %p115 = scmp.le.s32.totalorder 1, %s18
      %p116 = scmp.lt.s32.totalorder %s18, 3
      %p117 = pnand %p115, %p116
      %p118 = pneg %p117
      // Predicated region
      $region9: #{tpu_custom_call.1} parent=5 // pred_check
        _
      $region10: #{tpu_custom_call.1} parent=5 // pred_check_branch
        %120 = sbr.rel (%p117) target = $region12
      $region11: #{tpu_custom_call.1} parent=5 // pred_region
        %s121 = ssub.s32 %s18, 1
        // Predicated region
        $region13: #{tpu_custom_call.1} parent=11 // pred_check
          %p122 = pneg %p81
        $region14: #{tpu_custom_call.1} parent=11 // pred_check_branch
          %124 = sbr.rel (%p122) target = $region16
        $region15: #{tpu_custom_call.1} parent=11 // pred_region
          %s126 = ssub.s32 4096, 4096
          %127 = vsyncadd [#allocation9], %s126
          %s128 = sshll.u32 [#allocation8], 4
          %s129 = int_to_ptr.vmem [resolvable:$true] %s128
          %134 = dma.hbm_to_vmem [thread:$0]  %s2, 4096, %s129, [#allocation9], 128, 128, 8
        $region16: #{tpu_custom_call.1} parent=11 // pred_fallthru
          _
      $region12: #{tpu_custom_call.1} parent=5 // pred_fallthru
        _
      %p135 = scmp.lt.s32.totalorder %s18, 2
      // Predicated region
      $region17: #{tpu_custom_call.1} parent=5 // pred_check
        %p136 = pneg %p135
      $region18: #{tpu_custom_call.1} parent=5 // pred_check_branch
        %138 = sbr.rel (%p136) target = $region20
      $region19: #{tpu_custom_call.1} parent=5 // pred_region
        // Predicated region
        $region21: #{tpu_custom_call.1} parent=19 // pred_check
          %p139 = pneg %p54
        $region22: #{tpu_custom_call.1} parent=19 // pred_check_branch
          %141 = sbr.rel (%p139) target = $region24
        $region23: #{tpu_custom_call.1} parent=19 // pred_region
          %s142 = sand.u32 %s44, 1
          %s143 = scalar_lea.sflag [#allocation6], %s142
          %s144 = sand.u32 %s44, 1
          %s145 = smul.addr %s144, 64
          %s146 = scalar_lea.vmem [#allocation5], %s145
          %s147 = sld [smem:[#allocation4 + %s26]]
          %s148 = smul.u32 8, %s25
          %s150 = ssub.s32 1024, 1024
          %151 = vsyncadd %s143, %s150
          %s152 = smul.addr %s148, 2
          %s153 = sadd.s32 %s147, %s152
          %s154 = smul.addr %s153, 128
          %s155 = scalar_lea.hbm %s1, %s154
          %s156 = sshll.u32 %s146, 4
          %s157 = int_to_ptr.vmem [resolvable:$true] %s156
          %162 = dma.hbm_to_vmem [thread:$0]  %s155, 1024, %s157, %s143, 256, 128, 8
        $region24: #{tpu_custom_call.1} parent=19 // pred_fallthru
          _
      $region20: #{tpu_custom_call.1} parent=5 // pred_fallthru
        _
      %p163 = scmp.le.s32.totalorder 1, %s18
      %p164 = scmp.lt.s32.totalorder %s18, 3
      %p165 = pnand %p163, %p164
      %p166 = pneg %p165
      // Predicated region
      $region25: #{tpu_custom_call.1} parent=5 // pred_check
        _
      $region26: #{tpu_custom_call.1} parent=5 // pred_check_branch
        %168 = sbr.rel (%p165) target = $region28
      $region27: #{tpu_custom_call.1} parent=5 // pred_region
        %s169 = ssub.s32 %s18, 1
        %s170 = sand.u32 %s47, 1
        %s171 = scalar_lea.sflag [#allocation6], %s170
        %s172 = sand.u32 %s47, 1
        %s173 = smul.addr %s172, 64
        %s174 = scalar_lea.vmem [#allocation5], %s173
        // Predicated region
        $region29: #{tpu_custom_call.1} parent=27 // pred_check
          %p175 = pneg %p60
        $region30: #{tpu_custom_call.1} parent=27 // pred_check_branch
          %177 = sbr.rel (%p175) target = $region32
        $region31: #{tpu_custom_call.1} parent=27 // pred_region
          %178 = dma.done %s171, 1024
        $region32: #{tpu_custom_call.1} parent=27 // pred_fallthru
          _
        // Predicated region
        $region33: #{tpu_custom_call.1} parent=27 // pred_check
          %p179 = pneg %p81
        $region34: #{tpu_custom_call.1} parent=27 // pred_check_branch
          %181 = sbr.rel (%p179) target = $region36
        $region35: #{tpu_custom_call.1} parent=27 // pred_region
          %182 = dma.done [#allocation9], 4096
        $region36: #{tpu_custom_call.1} parent=27 // pred_fallthru
          _
        %s183 = sand.u32 %s47, 1
        %s184 = scalar_lea.sflag [#allocation6], %s183
        %s185 = sand.u32 %s47, 1
        %s186 = smul.addr %s185, 64
        %s187 = scalar_lea.vmem [#allocation5], %s186
        %p188 = pneg %p60
        %p189 = pneg %p57
        %p190 = pneg %p81
        %p191 = pneg %p78
        %p192 = pneg %p107
        %p193 = pneg %p104
        %s194 = sld [smem:[#allocation4 + %s28]]
        %s195 = smul.u32 8, %s27
        %v196 = vld [vmem:[%s174] sm:$0x1]
        %v197 = vld [vmem:[%s174 + $0x8] sm:$0x1]
        %v198 = vld [vmem:[%s174 + $0x10] sm:$0x1]
        %v199 = vld [vmem:[%s174 + $0x18] sm:$0x1]
        %v200 = vld [vmem:[%s174 + $0x20] sm:$0x1]
        %v201 = vld [vmem:[%s174 + $0x28] sm:$0x1]
        %v202 = vld [vmem:[%s174 + $0x30] sm:$0x1]
        %v203 = vld [vmem:[%s174 + $0x38] sm:$0x1]
        %s204 = smul.u32 %s28, 128
        %s205 = scalar_lea.vmem [#allocation8], %s204
        %v206 = vld [vmem:[%s205] sm:$0xff]
        %v207 = vld [vmem:[%s205 + $0x8] sm:$0xff]
        %v208 = vld [vmem:[%s174 + $0x1] sm:$0x1]
        %v209 = vld [vmem:[%s174 + $0x9] sm:$0x1]
        %v210 = vld [vmem:[%s174 + $0x11] sm:$0x1]
        %v211 = vld [vmem:[%s174 + $0x19] sm:$0x1]
        %v212 = vld [vmem:[%s174 + $0x21] sm:$0x1]
        %v213 = vld [vmem:[%s174 + $0x29] sm:$0x1]
        %v214 = vld [vmem:[%s174 + $0x31] sm:$0x1]
        %v215 = vld [vmem:[%s174 + $0x39] sm:$0x1]
        %s216 = sadd.s32 16, %s204
        %s217 = scalar_lea.vmem [#allocation8], %s216
        %v218 = vld [vmem:[%s217] sm:$0xff]
        %v219 = vld [vmem:[%s217 + $0x8] sm:$0xff]
        %v228 = vrot.slane %v209, 7
        %vm229 = vcmask 1041409
        %v230 = vsel %vm229, %v228, %v208
        %v231 = vrot.slane %v210, 6
        %vm232 = vcmask 1042434
        %v233 = vsel %vm232, %v231, %v230
        %v234 = vrot.slane %v211, 5
        %vm235 = vcmask 1043459
        %v236 = vsel %vm235, %v234, %v233
        %v237 = vrot.slane %v212, 4
        %vm238 = vcmask 1044484
        %v239 = vsel %vm238, %v237, %v236
        %v240 = vrot.slane %v213, 3
        %vm241 = vcmask 1045509
        %v242 = vsel %vm241, %v240, %v239
        %v243 = vrot.slane %v214, 2
        %vm244 = vcmask 1046534
        %v245 = vsel %vm244, %v243, %v242
        %v246 = vrot.slane %v215, 1
        %vm247 = vcmask 1047559
        %v248 = vsel %vm247, %v246, %v245
        %vm249 = vcmask 130048
        %v250 = vsel %vm249, %v248, 0
        %252 = vmatprep.subr.mxu0 0.0
        %253 = vmatpush1.msra.mxu0 %v218
        %254 = vmatprep.subr.mxu0 0.0
        %255 = vmatpush1.msra.mxu0 %v219
        %256 = vmatprep.subr.mxu0 0.0
        %257 = vmatpush1.msra.mxu0 0.0
        %258 = vmatprep.subr.mxu0 0.0
        %259 = vmatpush1.msra.mxu0 0.0
        %260 = vmatprep.subr.mxu0 0.0
        %261 = vmatpush1.msra.mxu0 0.0
        %262 = vmatprep.subr.mxu0 0.0
        %263 = vmatpush1.msra.mxu0 0.0
        %264 = vmatprep.subr.mxu0 0.0
        %265 = vmatpush1.msra.mxu0 0.0
        %266 = vmatprep.subr.mxu0 0.0
        %267 = vmatpush1.msra.mxu0 0.0
        %268 = vmatprep.subr.mxu0 0.0
        %269 = vmatpush1.msra.mxu0 0.0
        %270 = vmatprep.subr.mxu0 0.0
        %271 = vmatpush1.msra.mxu0 0.0
        %272 = vmatprep.subr.mxu0 0.0
        %273 = vmatpush1.msra.mxu0 0.0
        %274 = vmatprep.subr.mxu0 0.0
        %275 = vmatpush1.msra.mxu0 0.0
        %276 = vmatprep.subr.mxu0 0.0
        %277 = vmatpush1.msra.mxu0 0.0
        %278 = vmatprep.subr.mxu0 0.0
        %279 = vmatpush1.msra.mxu0 0.0
        %280 = vmatprep.subr.mxu0 0.0
        %281 = vmatpush1.msra.mxu0 0.0
        %282 = vmatprep.subr.mxu0 0.0
        %283 = vmatpush1.msra.mxu0 0.0
        %284 = vmatprep.subr.mxu0 0.0
        %285 = vmatpush1.msra.mxu0 0.0
        %286 = vmatprep.subr.mxu0 0.0
        %287 = vmatpush1.msra.mxu0 0.0
        %288 = vmatprep.subr.mxu0 0.0
        %289 = vmatpush1.msra.mxu0 0.0
        %290 = vmatprep.subr.mxu0 0.0
        %291 = vmatpush1.msra.mxu0 0.0
        %292 = vmatprep.subr.mxu0 0.0
        %293 = vmatpush1.msra.mxu0 0.0
        %294 = vmatprep.subr.mxu0 0.0
        %295 = vmatpush1.msra.mxu0 0.0
        %296 = vmatprep.subr.mxu0 0.0
        %297 = vmatpush1.msra.mxu0 0.0
        %298 = vmatprep.subr.mxu0 0.0
        %299 = vmatpush1.msra.mxu0 0.0
        %300 = vmatprep.subr.mxu0 0.0
        %301 = vmatpush1.msra.mxu0 0.0
        %302 = vmatprep.subr.mxu0 0.0
        %303 = vmatpush1.msra.mxu0 0.0
        %304 = vmatprep.subr.mxu0 0.0
        %305 = vmatpush1.msra.mxu0 0.0
        %306 = vmatprep.subr.mxu0 0.0
        %307 = vmatpush1.msra.mxu0 0.0
        %308 = vmatprep.subr.mxu0 0.0
        %309 = vmatpush1.msra.mxu0 0.0
        %310 = vmatprep.subr.mxu0 0.0
        %311 = vmatpush1.msra.mxu0 0.0
        %312 = vmatprep.subr.mxu0 0.0
        %313 = vmatpush1.msra.mxu0 0.0
        %314 = vmatprep.subr.mxu0 0.0
        %315 = vmatpush1.msra.mxu0 0.0
        %316 = vmatprep.mubr.f32.mxu0 0.0
        %317 = vmatmul.mubr.f32.gmra.mrb[0].mxu0 %v250
        %v318 = vpop.f32.mrb[0].mxu0
        %v319 = vadd.f32 0.0, %v318
        %v320 = vpop.f32.mrb[0].mxu0
        %321 = vdwg.mxu0
        %v330 = vrot.slane %v197, 7
        %v331 = vsel %vm229, %v330, %v196
        %v332 = vrot.slane %v198, 6
        %v333 = vsel %vm232, %v332, %v331
        %v334 = vrot.slane %v199, 5
        %v335 = vsel %vm235, %v334, %v333
        %v336 = vrot.slane %v200, 4
        %v337 = vsel %vm238, %v336, %v335
        %v338 = vrot.slane %v201, 3
        %v339 = vsel %vm241, %v338, %v337
        %v340 = vrot.slane %v202, 2
        %v341 = vsel %vm244, %v340, %v339
        %v342 = vrot.slane %v203, 1
        %v343 = vsel %vm247, %v342, %v341
        %v344 = vsel %vm249, %v343, 0
        %346 = vmatprep.subr.mxu0 0.0
        %347 = vmatpush1.msra.mxu0 %v206
        %348 = vmatprep.subr.mxu0 0.0
        %349 = vmatpush1.msra.mxu0 %v207
        %350 = vmatprep.subr.mxu0 0.0
        %351 = vmatpush1.msra.mxu0 0.0
        %352 = vmatprep.subr.mxu0 0.0
        %353 = vmatpush1.msra.mxu0 0.0
        %354 = vmatprep.subr.mxu0 0.0
        %355 = vmatpush1.msra.mxu0 0.0
        %356 = vmatprep.subr.mxu0 0.0
        %357 = vmatpush1.msra.mxu0 0.0
        %358 = vmatprep.subr.mxu0 0.0
        %359 = vmatpush1.msra.mxu0 0.0
        %360 = vmatprep.subr.mxu0 0.0
        %361 = vmatpush1.msra.mxu0 0.0
        %362 = vmatprep.subr.mxu0 0.0
        %363 = vmatpush1.msra.mxu0 0.0
        %364 = vmatprep.subr.mxu0 0.0
        %365 = vmatpush1.msra.mxu0 0.0
        %366 = vmatprep.subr.mxu0 0.0
        %367 = vmatpush1.msra.mxu0 0.0
        %368 = vmatprep.subr.mxu0 0.0
        %369 = vmatpush1.msra.mxu0 0.0
        %370 = vmatprep.subr.mxu0 0.0
        %371 = vmatpush1.msra.mxu0 0.0
        %372 = vmatprep.subr.mxu0 0.0
        %373 = vmatpush1.msra.mxu0 0.0
        %374 = vmatprep.subr.mxu0 0.0
        %375 = vmatpush1.msra.mxu0 0.0
        %376 = vmatprep.subr.mxu0 0.0
        %377 = vmatpush1.msra.mxu0 0.0
        %378 = vmatprep.subr.mxu0 0.0
        %379 = vmatpush1.msra.mxu0 0.0
        %380 = vmatprep.subr.mxu0 0.0
        %381 = vmatpush1.msra.mxu0 0.0
        %382 = vmatprep.subr.mxu0 0.0
        %383 = vmatpush1.msra.mxu0 0.0
        %384 = vmatprep.subr.mxu0 0.0
        %385 = vmatpush1.msra.mxu0 0.0
        %386 = vmatprep.subr.mxu0 0.0
        %387 = vmatpush1.msra.mxu0 0.0
        %388 = vmatprep.subr.mxu0 0.0
        %389 = vmatpush1.msra.mxu0 0.0
        %390 = vmatprep.subr.mxu0 0.0
        %391 = vmatpush1.msra.mxu0 0.0
        %392 = vmatprep.subr.mxu0 0.0
        %393 = vmatpush1.msra.mxu0 0.0
        %394 = vmatprep.subr.mxu0 0.0
        %395 = vmatpush1.msra.mxu0 0.0
        %396 = vmatprep.subr.mxu0 0.0
        %397 = vmatpush1.msra.mxu0 0.0
        %398 = vmatprep.subr.mxu0 0.0
        %399 = vmatpush1.msra.mxu0 0.0
        %400 = vmatprep.subr.mxu0 0.0
        %401 = vmatpush1.msra.mxu0 0.0
        %402 = vmatprep.subr.mxu0 0.0
        %403 = vmatpush1.msra.mxu0 0.0
        %404 = vmatprep.subr.mxu0 0.0
        %405 = vmatpush1.msra.mxu0 0.0
        %406 = vmatprep.subr.mxu0 0.0
        %407 = vmatpush1.msra.mxu0 0.0
        %408 = vmatprep.subr.mxu0 0.0
        %409 = vmatpush1.msra.mxu0 0.0
        %410 = vmatprep.mubr.f32.mxu0 0.0
        %411 = vmatmul.mubr.f32.gmra.mrb[0].mxu0 %v344
        %v412 = vpop.f32.mrb[0].mxu0
        %v413 = vadd.f32 %v319, %v412
        %v414 = vpop.f32.mrb[0].mxu0
        %415 = vdwg.mxu0
        %v416 = vld [vmem:[%s174 + $0x2] sm:$0x1]
        %v417 = vld [vmem:[%s174 + $0xa] sm:$0x1]
        %v418 = vld [vmem:[%s174 + $0x12] sm:$0x1]
        %v419 = vld [vmem:[%s174 + $0x1a] sm:$0x1]
        %v420 = vld [vmem:[%s174 + $0x22] sm:$0x1]
        %v421 = vld [vmem:[%s174 + $0x2a] sm:$0x1]
        %v422 = vld [vmem:[%s174 + $0x32] sm:$0x1]
        %v423 = vld [vmem:[%s174 + $0x3a] sm:$0x1]
        %s424 = sadd.s32 32, %s204
        %s425 = scalar_lea.vmem [#allocation8], %s424
        %v426 = vld [vmem:[%s425] sm:$0xff]
        %v427 = vld [vmem:[%s425 + $0x8] sm:$0xff]
        %v436 = vrot.slane %v417, 7
        %v437 = vsel %vm229, %v436, %v416
        %v438 = vrot.slane %v418, 6
        %v439 = vsel %vm232, %v438, %v437
        %v440 = vrot.slane %v419, 5
        %v441 = vsel %vm235, %v440, %v439
        %v442 = vrot.slane %v420, 4
        %v443 = vsel %vm238, %v442, %v441
        %v444 = vrot.slane %v421, 3
        %v445 = vsel %vm241, %v444, %v443
        %v446 = vrot.slane %v422, 2
        %v447 = vsel %vm244, %v446, %v445
        %v448 = vrot.slane %v423, 1
        %v449 = vsel %vm247, %v448, %v447
        %v450 = vsel %vm249, %v449, 0
        %452 = vmatprep.subr.mxu0 0.0
        %453 = vmatpush1.msra.mxu0 %v426
        %454 = vmatprep.subr.mxu0 0.0
        %455 = vmatpush1.msra.mxu0 %v427
        %456 = vmatprep.subr.mxu0 0.0
        %457 = vmatpush1.msra.mxu0 0.0
        %458 = vmatprep.subr.mxu0 0.0
        %459 = vmatpush1.msra.mxu0 0.0
        %460 = vmatprep.subr.mxu0 0.0
        %461 = vmatpush1.msra.mxu0 0.0
        %462 = vmatprep.subr.mxu0 0.0
        %463 = vmatpush1.msra.mxu0 0.0
        %464 = vmatprep.subr.mxu0 0.0
        %465 = vmatpush1.msra.mxu0 0.0
        %466 = vmatprep.subr.mxu0 0.0
        %467 = vmatpush1.msra.mxu0 0.0
        %468 = vmatprep.subr.mxu0 0.0
        %469 = vmatpush1.msra.mxu0 0.0
        %470 = vmatprep.subr.mxu0 0.0
        %471 = vmatpush1.msra.mxu0 0.0
        %472 = vmatprep.subr.mxu0 0.0
        %473 = vmatpush1.msra.mxu0 0.0
        %474 = vmatprep.subr.mxu0 0.0
        %475 = vmatpush1.msra.mxu0 0.0
        %476 = vmatprep.subr.mxu0 0.0
        %477 = vmatpush1.msra.mxu0 0.0
        %478 = vmatprep.subr.mxu0 0.0
        %479 = vmatpush1.msra.mxu0 0.0
        %480 = vmatprep.subr.mxu0 0.0
        %481 = vmatpush1.msra.mxu0 0.0
        %482 = vmatprep.subr.mxu0 0.0
        %483 = vmatpush1.msra.mxu0 0.0
        %484 = vmatprep.subr.mxu0 0.0
        %485 = vmatpush1.msra.mxu0 0.0
        %486 = vmatprep.subr.mxu0 0.0
        %487 = vmatpush1.msra.mxu0 0.0
        %488 = vmatprep.subr.mxu0 0.0
        %489 = vmatpush1.msra.mxu0 0.0
        %490 = vmatprep.subr.mxu0 0.0
        %491 = vmatpush1.msra.mxu0 0.0
        %492 = vmatprep.subr.mxu0 0.0
        %493 = vmatpush1.msra.mxu0 0.0
        %494 = vmatprep.subr.mxu0 0.0
        %495 = vmatpush1.msra.mxu0 0.0
        %496 = vmatprep.subr.mxu0 0.0
        %497 = vmatpush1.msra.mxu0 0.0
        %498 = vmatprep.subr.mxu0 0.0
        %499 = vmatpush1.msra.mxu0 0.0
        %500 = vmatprep.subr.mxu0 0.0
        %501 = vmatpush1.msra.mxu0 0.0
        %502 = vmatprep.subr.mxu0 0.0
        %503 = vmatpush1.msra.mxu0 0.0
        %504 = vmatprep.subr.mxu0 0.0
        %505 = vmatpush1.msra.mxu0 0.0
        %506 = vmatprep.subr.mxu0 0.0
        %507 = vmatpush1.msra.mxu0 0.0
        %508 = vmatprep.subr.mxu0 0.0
        %509 = vmatpush1.msra.mxu0 0.0
        %510 = vmatprep.subr.mxu0 0.0
        %511 = vmatpush1.msra.mxu0 0.0
        %512 = vmatprep.subr.mxu0 0.0
        %513 = vmatpush1.msra.mxu0 0.0
        %514 = vmatprep.subr.mxu0 0.0
        %515 = vmatpush1.msra.mxu0 0.0
        %516 = vmatprep.mubr.f32.mxu0 0.0
        %517 = vmatmul.mubr.f32.gmra.mrb[0].mxu0 %v450
        %v518 = vpop.f32.mrb[0].mxu0
        %v519 = vadd.f32 0.0, %v518
        %v520 = vpop.f32.mrb[0].mxu0
        %521 = vdwg.mxu0
        %v522 = vadd.f32 %v413, %v519
        %v523 = vld [vmem:[%s174 + $0x3] sm:$0x1]
        %v524 = vld [vmem:[%s174 + $0xb] sm:$0x1]
        %v525 = vld [vmem:[%s174 + $0x13] sm:$0x1]
        %v526 = vld [vmem:[%s174 + $0x1b] sm:$0x1]
        %v527 = vld [vmem:[%s174 + $0x23] sm:$0x1]
        %v528 = vld [vmem:[%s174 + $0x2b] sm:$0x1]
        %v529 = vld [vmem:[%s174 + $0x33] sm:$0x1]
        %v530 = vld [vmem:[%s174 + $0x3b] sm:$0x1]
        %s531 = sadd.s32 48, %s204
        %s532 = scalar_lea.vmem [#allocation8], %s531
        %v533 = vld [vmem:[%s532] sm:$0xff]
        %v534 = vld [vmem:[%s532 + $0x8] sm:$0xff]
        %v543 = vrot.slane %v524, 7
        %v544 = vsel %vm229, %v543, %v523
        %v545 = vrot.slane %v525, 6
        %v546 = vsel %vm232, %v545, %v544
        %v547 = vrot.slane %v526, 5
        %v548 = vsel %vm235, %v547, %v546
        %v549 = vrot.slane %v527, 4
        %v550 = vsel %vm238, %v549, %v548
        %v551 = vrot.slane %v528, 3
        %v552 = vsel %vm241, %v551, %v550
        %v553 = vrot.slane %v529, 2
        %v554 = vsel %vm244, %v553, %v552
        %v555 = vrot.slane %v530, 1
        %v556 = vsel %vm247, %v555, %v554
        %v557 = vsel %vm249, %v556, 0
        %559 = vmatprep.subr.mxu0 0.0
        %560 = vmatpush1.msra.mxu0 %v533
        %561 = vmatprep.subr.mxu0 0.0
        %562 = vmatpush1.msra.mxu0 %v534
        %563 = vmatprep.subr.mxu0 0.0
        %564 = vmatpush1.msra.mxu0 0.0
        %565 = vmatprep.subr.mxu0 0.0
        %566 = vmatpush1.msra.mxu0 0.0
        %567 = vmatprep.subr.mxu0 0.0
        %568 = vmatpush1.msra.mxu0 0.0
        %569 = vmatprep.subr.mxu0 0.0
        %570 = vmatpush1.msra.mxu0 0.0
        %571 = vmatprep.subr.mxu0 0.0
        %572 = vmatpush1.msra.mxu0 0.0
        %573 = vmatprep.subr.mxu0 0.0
        %574 = vmatpush1.msra.mxu0 0.0
        %575 = vmatprep.subr.mxu0 0.0
        %576 = vmatpush1.msra.mxu0 0.0
        %577 = vmatprep.subr.mxu0 0.0
        %578 = vmatpush1.msra.mxu0 0.0
        %579 = vmatprep.subr.mxu0 0.0
        %580 = vmatpush1.msra.mxu0 0.0
        %581 = vmatprep.subr.mxu0 0.0
        %582 = vmatpush1.msra.mxu0 0.0
        %583 = vmatprep.subr.mxu0 0.0
        %584 = vmatpush1.msra.mxu0 0.0
        %585 = vmatprep.subr.mxu0 0.0
        %586 = vmatpush1.msra.mxu0 0.0
        %587 = vmatprep.subr.mxu0 0.0
        %588 = vmatpush1.msra.mxu0 0.0
        %589 = vmatprep.subr.mxu0 0.0
        %590 = vmatpush1.msra.mxu0 0.0
        %591 = vmatprep.subr.mxu0 0.0
        %592 = vmatpush1.msra.mxu0 0.0
        %593 = vmatprep.subr.mxu0 0.0
        %594 = vmatpush1.msra.mxu0 0.0
        %595 = vmatprep.subr.mxu0 0.0
        %596 = vmatpush1.msra.mxu0 0.0
        %597 = vmatprep.subr.mxu0 0.0
        %598 = vmatpush1.msra.mxu0 0.0
        %599 = vmatprep.subr.mxu0 0.0
        %600 = vmatpush1.msra.mxu0 0.0
        %601 = vmatprep.subr.mxu0 0.0
        %602 = vmatpush1.msra.mxu0 0.0
        %603 = vmatprep.subr.mxu0 0.0
        %604 = vmatpush1.msra.mxu0 0.0
        %605 = vmatprep.subr.mxu0 0.0
        %606 = vmatpush1.msra.mxu0 0.0
        %607 = vmatprep.subr.mxu0 0.0
        %608 = vmatpush1.msra.mxu0 0.0
        %609 = vmatprep.subr.mxu0 0.0
        %610 = vmatpush1.msra.mxu0 0.0
        %611 = vmatprep.subr.mxu0 0.0
        %612 = vmatpush1.msra.mxu0 0.0
        %613 = vmatprep.subr.mxu0 0.0
        %614 = vmatpush1.msra.mxu0 0.0
        %615 = vmatprep.subr.mxu0 0.0
        %616 = vmatpush1.msra.mxu0 0.0
        %617 = vmatprep.subr.mxu0 0.0
        %618 = vmatpush1.msra.mxu0 0.0
        %619 = vmatprep.subr.mxu0 0.0
        %620 = vmatpush1.msra.mxu0 0.0
        %621 = vmatprep.subr.mxu0 0.0
        %622 = vmatpush1.msra.mxu0 0.0
        %623 = vmatprep.mubr.f32.mxu0 0.0
        %624 = vmatmul.mubr.f32.gmra.mrb[0].mxu0 %v557
        %v625 = vpop.f32.mrb[0].mxu0
        %v626 = vadd.f32 0.0, %v625
        %v627 = vpop.f32.mrb[0].mxu0
        %628 = vdwg.mxu0
        %v629 = vadd.f32 %v522, %v626
        %v630 = vld [vmem:[%s174 + $0x4] sm:$0x1]
        %v631 = vld [vmem:[%s174 + $0xc] sm:$0x1]
        %v632 = vld [vmem:[%s174 + $0x14] sm:$0x1]
        %v633 = vld [vmem:[%s174 + $0x1c] sm:$0x1]
        %v634 = vld [vmem:[%s174 + $0x24] sm:$0x1]
        %v635 = vld [vmem:[%s174 + $0x2c] sm:$0x1]
        %v636 = vld [vmem:[%s174 + $0x34] sm:$0x1]
        %v637 = vld [vmem:[%s174 + $0x3c] sm:$0x1]
        %s638 = sadd.s32 64, %s204
        %s639 = scalar_lea.vmem [#allocation8], %s638
        %v640 = vld [vmem:[%s639] sm:$0xff]
        %v641 = vld [vmem:[%s639 + $0x8] sm:$0xff]
        %v650 = vrot.slane %v631, 7
        %v651 = vsel %vm229, %v650, %v630
        %v652 = vrot.slane %v632, 6
        %v653 = vsel %vm232, %v652, %v651
        %v654 = vrot.slane %v633, 5
        %v655 = vsel %vm235, %v654, %v653
        %v656 = vrot.slane %v634, 4
        %v657 = vsel %vm238, %v656, %v655
        %v658 = vrot.slane %v635, 3
        %v659 = vsel %vm241, %v658, %v657
        %v660 = vrot.slane %v636, 2
        %v661 = vsel %vm244, %v660, %v659
        %v662 = vrot.slane %v637, 1
        %v663 = vsel %vm247, %v662, %v661
        %v664 = vsel %vm249, %v663, 0
        %666 = vmatprep.subr.mxu0 0.0
        %667 = vmatpush1.msra.mxu0 %v640
        %668 = vmatprep.subr.mxu0 0.0
        %669 = vmatpush1.msra.mxu0 %v641
        %670 = vmatprep.subr.mxu0 0.0
        %671 = vmatpush1.msra.mxu0 0.0
        %672 = vmatprep.subr.mxu0 0.0
        %673 = vmatpush1.msra.mxu0 0.0
        %674 = vmatprep.subr.mxu0 0.0
        %675 = vmatpush1.msra.mxu0 0.0
        %676 = vmatprep.subr.mxu0 0.0
        %677 = vmatpush1.msra.mxu0 0.0
        %678 = vmatprep.subr.mxu0 0.0
        %679 = vmatpush1.msra.mxu0 0.0
        %680 = vmatprep.subr.mxu0 0.0
        %681 = vmatpush1.msra.mxu0 0.0
        %682 = vmatprep.subr.mxu0 0.0
        %683 = vmatpush1.msra.mxu0 0.0
        %684 = vmatprep.subr.mxu0 0.0
        %685 = vmatpush1.msra.mxu0 0.0
        %686 = vmatprep.subr.mxu0 0.0
        %687 = vmatpush1.msra.mxu0 0.0
        %688 = vmatprep.subr.mxu0 0.0
        %689 = vmatpush1.msra.mxu0 0.0
        %690 = vmatprep.subr.mxu0 0.0
        %691 = vmatpush1.msra.mxu0 0.0
        %692 = vmatprep.subr.mxu0 0.0
        %693 = vmatpush1.msra.mxu0 0.0
        %694 = vmatprep.subr.mxu0 0.0
        %695 = vmatpush1.msra.mxu0 0.0
        %696 = vmatprep.subr.mxu0 0.0
        %697 = vmatpush1.msra.mxu0 0.0
        %698 = vmatprep.subr.mxu0 0.0
        %699 = vmatpush1.msra.mxu0 0.0
        %700 = vmatprep.subr.mxu0 0.0
        %701 = vmatpush1.msra.mxu0 0.0
        %702 = vmatprep.subr.mxu0 0.0
        %703 = vmatpush1.msra.mxu0 0.0
        %704 = vmatprep.subr.mxu0 0.0
        %705 = vmatpush1.msra.mxu0 0.0
        %706 = vmatprep.subr.mxu0 0.0
        %707 = vmatpush1.msra.mxu0 0.0
        %708 = vmatprep.subr.mxu0 0.0
        %709 = vmatpush1.msra.mxu0 0.0
        %710 = vmatprep.subr.mxu0 0.0
        %711 = vmatpush1.msra.mxu0 0.0
        %712 = vmatprep.subr.mxu0 0.0
        %713 = vmatpush1.msra.mxu0 0.0
        %714 = vmatprep.subr.mxu0 0.0
        %715 = vmatpush1.msra.mxu0 0.0
        %716 = vmatprep.subr.mxu0 0.0
        %717 = vmatpush1.msra.mxu0 0.0
        %718 = vmatprep.subr.mxu0 0.0
        %719 = vmatpush1.msra.mxu0 0.0
        %720 = vmatprep.subr.mxu0 0.0
        %721 = vmatpush1.msra.mxu0 0.0
        %722 = vmatprep.subr.mxu0 0.0
        %723 = vmatpush1.msra.mxu0 0.0
        %724 = vmatprep.subr.mxu0 0.0
        %725 = vmatpush1.msra.mxu0 0.0
        %726 = vmatprep.subr.mxu0 0.0
        %727 = vmatpush1.msra.mxu0 0.0
        %728 = vmatprep.subr.mxu0 0.0
        %729 = vmatpush1.msra.mxu0 0.0
        %730 = vmatprep.mubr.f32.mxu0 0.0
        %731 = vmatmul.mubr.f32.gmra.mrb[0].mxu0 %v664
        %v732 = vpop.f32.mrb[0].mxu0
        %v733 = vadd.f32 0.0, %v732
        %v734 = vpop.f32.mrb[0].mxu0
        %735 = vdwg.mxu0
        %v736 = vadd.f32 %v629, %v733
        %v737 = vld [vmem:[%s174 + $0x5] sm:$0x1]
        %v738 = vld [vmem:[%s174 + $0xd] sm:$0x1]
        %v739 = vld [vmem:[%s174 + $0x15] sm:$0x1]
        %v740 = vld [vmem:[%s174 + $0x1d] sm:$0x1]
        %v741 = vld [vmem:[%s174 + $0x25] sm:$0x1]
        %v742 = vld [vmem:[%s174 + $0x2d] sm:$0x1]
        %v743 = vld [vmem:[%s174 + $0x35] sm:$0x1]
        %v744 = vld [vmem:[%s174 + $0x3d] sm:$0x1]
        %s745 = sadd.s32 80, %s204
        %s746 = scalar_lea.vmem [#allocation8], %s745
        %v747 = vld [vmem:[%s746] sm:$0xff]
        %v748 = vld [vmem:[%s746 + $0x8] sm:$0xff]
        %v757 = vrot.slane %v738, 7
        %v758 = vsel %vm229, %v757, %v737
        %v759 = vrot.slane %v739, 6
        %v760 = vsel %vm232, %v759, %v758
        %v761 = vrot.slane %v740, 5
        %v762 = vsel %vm235, %v761, %v760
        %v763 = vrot.slane %v741, 4
        %v764 = vsel %vm238, %v763, %v762
        %v765 = vrot.slane %v742, 3
        %v766 = vsel %vm241, %v765, %v764
        %v767 = vrot.slane %v743, 2
        %v768 = vsel %vm244, %v767, %v766
        %v769 = vrot.slane %v744, 1
        %v770 = vsel %vm247, %v769, %v768
        %v771 = vsel %vm249, %v770, 0
        %773 = vmatprep.subr.mxu0 0.0
        %774 = vmatpush1.msra.mxu0 %v747
        %775 = vmatprep.subr.mxu0 0.0
        %776 = vmatpush1.msra.mxu0 %v748
        %777 = vmatprep.subr.mxu0 0.0
        %778 = vmatpush1.msra.mxu0 0.0
        %779 = vmatprep.subr.mxu0 0.0
        %780 = vmatpush1.msra.mxu0 0.0
        %781 = vmatprep.subr.mxu0 0.0
        %782 = vmatpush1.msra.mxu0 0.0
        %783 = vmatprep.subr.mxu0 0.0
        %784 = vmatpush1.msra.mxu0 0.0
        %785 = vmatprep.subr.mxu0 0.0
        %786 = vmatpush1.msra.mxu0 0.0
        %787 = vmatprep.subr.mxu0 0.0
        %788 = vmatpush1.msra.mxu0 0.0
        %789 = vmatprep.subr.mxu0 0.0
        %790 = vmatpush1.msra.mxu0 0.0
        %791 = vmatprep.subr.mxu0 0.0
        %792 = vmatpush1.msra.mxu0 0.0
        %793 = vmatprep.subr.mxu0 0.0
        %794 = vmatpush1.msra.mxu0 0.0
        %795 = vmatprep.subr.mxu0 0.0
        %796 = vmatpush1.msra.mxu0 0.0
        %797 = vmatprep.subr.mxu0 0.0
        %798 = vmatpush1.msra.mxu0 0.0
        %799 = vmatprep.subr.mxu0 0.0
        %800 = vmatpush1.msra.mxu0 0.0
        %801 = vmatprep.subr.mxu0 0.0
        %802 = vmatpush1.msra.mxu0 0.0
        %803 = vmatprep.subr.mxu0 0.0
        %804 = vmatpush1.msra.mxu0 0.0
        %805 = vmatprep.subr.mxu0 0.0
        %806 = vmatpush1.msra.mxu0 0.0
        %807 = vmatprep.subr.mxu0 0.0
        %808 = vmatpush1.msra.mxu0 0.0
        %809 = vmatprep.subr.mxu0 0.0
        %810 = vmatpush1.msra.mxu0 0.0
        %811 = vmatprep.subr.mxu0 0.0
        %812 = vmatpush1.msra.mxu0 0.0
        %813 = vmatprep.subr.mxu0 0.0
        %814 = vmatpush1.msra.mxu0 0.0
        %815 = vmatprep.subr.mxu0 0.0
        %816 = vmatpush1.msra.mxu0 0.0
        %817 = vmatprep.subr.mxu0 0.0
        %818 = vmatpush1.msra.mxu0 0.0
        %819 = vmatprep.subr.mxu0 0.0
        %820 = vmatpush1.msra.mxu0 0.0
        %821 = vmatprep.subr.mxu0 0.0
        %822 = vmatpush1.msra.mxu0 0.0
        %823 = vmatprep.subr.mxu0 0.0
        %824 = vmatpush1.msra.mxu0 0.0
        %825 = vmatprep.subr.mxu0 0.0
        %826 = vmatpush1.msra.mxu0 0.0
        %827 = vmatprep.subr.mxu0 0.0
        %828 = vmatpush1.msra.mxu0 0.0
        %829 = vmatprep.subr.mxu0 0.0
        %830 = vmatpush1.msra.mxu0 0.0
        %831 = vmatprep.subr.mxu0 0.0
        %832 = vmatpush1.msra.mxu0 0.0
        %833 = vmatprep.subr.mxu0 0.0
        %834 = vmatpush1.msra.mxu0 0.0
        %835 = vmatprep.subr.mxu0 0.0
        %836 = vmatpush1.msra.mxu0 0.0
        %837 = vmatprep.mubr.f32.mxu0 0.0
        %838 = vmatmul.mubr.f32.gmra.mrb[0].mxu0 %v771
        %v839 = vpop.f32.mrb[0].mxu0
        %v840 = vadd.f32 0.0, %v839
        %v841 = vpop.f32.mrb[0].mxu0
        %842 = vdwg.mxu0
        %v843 = vadd.f32 %v736, %v840
        %v844 = vld [vmem:[%s174 + $0x6] sm:$0x1]
        %v845 = vld [vmem:[%s174 + $0xe] sm:$0x1]
        %v846 = vld [vmem:[%s174 + $0x16] sm:$0x1]
        %v847 = vld [vmem:[%s174 + $0x1e] sm:$0x1]
        %v848 = vld [vmem:[%s174 + $0x26] sm:$0x1]
        %v849 = vld [vmem:[%s174 + $0x2e] sm:$0x1]
        %v850 = vld [vmem:[%s174 + $0x36] sm:$0x1]
        %v851 = vld [vmem:[%s174 + $0x3e] sm:$0x1]
        %s852 = sadd.s32 96, %s204
        %s853 = scalar_lea.vmem [#allocation8], %s852
        %v854 = vld [vmem:[%s853] sm:$0xff]
        %v855 = vld [vmem:[%s853 + $0x8] sm:$0xff]
        %v864 = vrot.slane %v845, 7
        %v865 = vsel %vm229, %v864, %v844
        %v866 = vrot.slane %v846, 6
        %v867 = vsel %vm232, %v866, %v865
        %v868 = vrot.slane %v847, 5
        %v869 = vsel %vm235, %v868, %v867
        %v870 = vrot.slane %v848, 4
        %v871 = vsel %vm238, %v870, %v869
        %v872 = vrot.slane %v849, 3
        %v873 = vsel %vm241, %v872, %v871
        %v874 = vrot.slane %v850, 2
        %v875 = vsel %vm244, %v874, %v873
        %v876 = vrot.slane %v851, 1
        %v877 = vsel %vm247, %v876, %v875
        %v878 = vsel %vm249, %v877, 0
        %880 = vmatprep.subr.mxu0 0.0
        %881 = vmatpush1.msra.mxu0 %v854
        %882 = vmatprep.subr.mxu0 0.0
        %883 = vmatpush1.msra.mxu0 %v855
        %884 = vmatprep.subr.mxu0 0.0
        %885 = vmatpush1.msra.mxu0 0.0
        %886 = vmatprep.subr.mxu0 0.0
        %887 = vmatpush1.msra.mxu0 0.0
        %888 = vmatprep.subr.mxu0 0.0
        %889 = vmatpush1.msra.mxu0 0.0
        %890 = vmatprep.subr.mxu0 0.0
        %891 = vmatpush1.msra.mxu0 0.0
        %892 = vmatprep.subr.mxu0 0.0
        %893 = vmatpush1.msra.mxu0 0.0
        %894 = vmatprep.subr.mxu0 0.0
        %895 = vmatpush1.msra.mxu0 0.0
        %896 = vmatprep.subr.mxu0 0.0
        %897 = vmatpush1.msra.mxu0 0.0
        %898 = vmatprep.subr.mxu0 0.0
        %899 = vmatpush1.msra.mxu0 0.0
        %900 = vmatprep.subr.mxu0 0.0
        %901 = vmatpush1.msra.mxu0 0.0
        %902 = vmatprep.subr.mxu0 0.0
        %903 = vmatpush1.msra.mxu0 0.0
        %904 = vmatprep.subr.mxu0 0.0
        %905 = vmatpush1.msra.mxu0 0.0
        %906 = vmatprep.subr.mxu0 0.0
        %907 = vmatpush1.msra.mxu0 0.0
        %908 = vmatprep.subr.mxu0 0.0
        %909 = vmatpush1.msra.mxu0 0.0
        %910 = vmatprep.subr.mxu0 0.0
        %911 = vmatpush1.msra.mxu0 0.0
        %912 = vmatprep.subr.mxu0 0.0
        %913 = vmatpush1.msra.mxu0 0.0
        %914 = vmatprep.subr.mxu0 0.0
        %915 = vmatpush1.msra.mxu0 0.0
        %916 = vmatprep.subr.mxu0 0.0
        %917 = vmatpush1.msra.mxu0 0.0
        %918 = vmatprep.subr.mxu0 0.0
        %919 = vmatpush1.msra.mxu0 0.0
        %920 = vmatprep.subr.mxu0 0.0
        %921 = vmatpush1.msra.mxu0 0.0
        %922 = vmatprep.subr.mxu0 0.0
        %923 = vmatpush1.msra.mxu0 0.0
        %924 = vmatprep.subr.mxu0 0.0
        %925 = vmatpush1.msra.mxu0 0.0
        %926 = vmatprep.subr.mxu0 0.0
        %927 = vmatpush1.msra.mxu0 0.0
        %928 = vmatprep.subr.mxu0 0.0
        %929 = vmatpush1.msra.mxu0 0.0
        %930 = vmatprep.subr.mxu0 0.0
        %931 = vmatpush1.msra.mxu0 0.0
        %932 = vmatprep.subr.mxu0 0.0
        %933 = vmatpush1.msra.mxu0 0.0
        %934 = vmatprep.subr.mxu0 0.0
        %935 = vmatpush1.msra.mxu0 0.0
        %936 = vmatprep.subr.mxu0 0.0
        %937 = vmatpush1.msra.mxu0 0.0
        %938 = vmatprep.subr.mxu0 0.0
        %939 = vmatpush1.msra.mxu0 0.0
        %940 = vmatprep.subr.mxu0 0.0
        %941 = vmatpush1.msra.mxu0 0.0
        %942 = vmatprep.subr.mxu0 0.0
        %943 = vmatpush1.msra.mxu0 0.0
        %944 = vmatprep.mubr.f32.mxu0 0.0
        %945 = vmatmul.mubr.f32.gmra.mrb[0].mxu0 %v878
        %v946 = vpop.f32.mrb[0].mxu0
        %v947 = vadd.f32 0.0, %v946
        %v948 = vpop.f32.mrb[0].mxu0
        %949 = vdwg.mxu0
        %v950 = vadd.f32 %v843, %v947
        %v951 = vld [vmem:[%s174 + $0x7] sm:$0x1]
        %v952 = vld [vmem:[%s174 + $0xf] sm:$0x1]
        %v953 = vld [vmem:[%s174 + $0x17] sm:$0x1]
        %v954 = vld [vmem:[%s174 + $0x1f] sm:$0x1]
        %v955 = vld [vmem:[%s174 + $0x27] sm:$0x1]
        %v956 = vld [vmem:[%s174 + $0x2f] sm:$0x1]
        %v957 = vld [vmem:[%s174 + $0x37] sm:$0x1]
        %v958 = vld [vmem:[%s174 + $0x3f] sm:$0x1]
        %s959 = sadd.s32 112, %s204
        %s960 = scalar_lea.vmem [#allocation8], %s959
        %v961 = vld [vmem:[%s960] sm:$0xff]
        %v962 = vld [vmem:[%s960 + $0x8] sm:$0xff]
        %v971 = vrot.slane %v952, 7
        %v972 = vsel %vm229, %v971, %v951
        %v973 = vrot.slane %v953, 6
        %v974 = vsel %vm232, %v973, %v972
        %v975 = vrot.slane %v954, 5
        %v976 = vsel %vm235, %v975, %v974
        %v977 = vrot.slane %v955, 4
        %v978 = vsel %vm238, %v977, %v976
        %v979 = vrot.slane %v956, 3
        %v980 = vsel %vm241, %v979, %v978
        %v981 = vrot.slane %v957, 2
        %v982 = vsel %vm244, %v981, %v980
        %v983 = vrot.slane %v958, 1
        %v984 = vsel %vm247, %v983, %v982
        %v985 = vsel %vm249, %v984, 0
        %987 = vmatprep.subr.mxu0 0.0
        %988 = vmatpush1.msra.mxu0 %v961
        %989 = vmatprep.subr.mxu0 0.0
        %990 = vmatpush1.msra.mxu0 %v962
        %991 = vmatprep.subr.mxu0 0.0
        %992 = vmatpush1.msra.mxu0 0.0
        %993 = vmatprep.subr.mxu0 0.0
        %994 = vmatpush1.msra.mxu0 0.0
        %995 = vmatprep.subr.mxu0 0.0
        %996 = vmatpush1.msra.mxu0 0.0
        %997 = vmatprep.subr.mxu0 0.0
        %998 = vmatpush1.msra.mxu0 0.0
        %999 = vmatprep.subr.mxu0 0.0
        %1000 = vmatpush1.msra.mxu0 0.0
        %1001 = vmatprep.subr.mxu0 0.0
        %1002 = vmatpush1.msra.mxu0 0.0
        %1003 = vmatprep.subr.mxu0 0.0
        %1004 = vmatpush1.msra.mxu0 0.0
        %1005 = vmatprep.subr.mxu0 0.0
        %1006 = vmatpush1.msra.mxu0 0.0
        %1007 = vmatprep.subr.mxu0 0.0
        %1008 = vmatpush1.msra.mxu0 0.0
        %1009 = vmatprep.subr.mxu0 0.0
        %1010 = vmatpush1.msra.mxu0 0.0
        %1011 = vmatprep.subr.mxu0 0.0
        %1012 = vmatpush1.msra.mxu0 0.0
        %1013 = vmatprep.subr.mxu0 0.0
        %1014 = vmatpush1.msra.mxu0 0.0
        %1015 = vmatprep.subr.mxu0 0.0
        %1016 = vmatpush1.msra.mxu0 0.0
        %1017 = vmatprep.subr.mxu0 0.0
        %1018 = vmatpush1.msra.mxu0 0.0
        %1019 = vmatprep.subr.mxu0 0.0
        %1020 = vmatpush1.msra.mxu0 0.0
        %1021 = vmatprep.subr.mxu0 0.0
        %1022 = vmatpush1.msra.mxu0 0.0
        %1023 = vmatprep.subr.mxu0 0.0
        %1024 = vmatpush1.msra.mxu0 0.0
        %1025 = vmatprep.subr.mxu0 0.0
        %1026 = vmatpush1.msra.mxu0 0.0
        %1027 = vmatprep.subr.mxu0 0.0
        %1028 = vmatpush1.msra.mxu0 0.0
        %1029 = vmatprep.subr.mxu0 0.0
        %1030 = vmatpush1.msra.mxu0 0.0
        %1031 = vmatprep.subr.mxu0 0.0
        %1032 = vmatpush1.msra.mxu0 0.0
        %1033 = vmatprep.subr.mxu0 0.0
        %1034 = vmatpush1.msra.mxu0 0.0
        %1035 = vmatprep.subr.mxu0 0.0
        %1036 = vmatpush1.msra.mxu0 0.0
        %1037 = vmatprep.subr.mxu0 0.0
        %1038 = vmatpush1.msra.mxu0 0.0
        %1039 = vmatprep.subr.mxu0 0.0
        %1040 = vmatpush1.msra.mxu0 0.0
        %1041 = vmatprep.subr.mxu0 0.0
        %1042 = vmatpush1.msra.mxu0 0.0
        %1043 = vmatprep.subr.mxu0 0.0
        %1044 = vmatpush1.msra.mxu0 0.0
        %1045 = vmatprep.subr.mxu0 0.0
        %1046 = vmatpush1.msra.mxu0 0.0
        %1047 = vmatprep.subr.mxu0 0.0
        %1048 = vmatpush1.msra.mxu0 0.0
        %1049 = vmatprep.subr.mxu0 0.0
        %1050 = vmatpush1.msra.mxu0 0.0
        %1051 = vmatprep.mubr.f32.mxu0 0.0
        %1052 = vmatmul.mubr.f32.gmra.mrb[0].mxu0 %v985
        %v1053 = vpop.f32.mrb[0].mxu0
        %v1054 = vadd.f32 0.0, %v1053
        %v1055 = vpop.f32.mrb[0].mxu0
        %1056 = vdwg.mxu0
        %v1057 = vadd.f32 %v950, %v1054
        %p1058 = scmp.eq.s32.totalorder %s28, 0
        // Predicated region
        $region37: #{tpu_custom_call.1} parent=27 // pred_check
          %p1059 = pneg %p1058
        $region38: #{tpu_custom_call.1} parent=27 // pred_check_branch
          %1061 = sbr.rel (%p1059) target = $region40
        $region39: #{tpu_custom_call.1} parent=27 // pred_region
          %1062 = vst [vmem:[#allocation2] sm:$0xff] 0.0
        $region40: #{tpu_custom_call.1} parent=27 // pred_fallthru
          _
        %v1063 = vld [vmem:[#allocation2] sm:$0xff]
        %v1064 = vadd.f32 %v1063, %v1057
        %1065 = vst [vmem:[#allocation2] sm:$0xff] %v1064
        %p1066 = scmp.eq.s32.totalorder %s28, 1
        // Predicated region
        $region41: #{tpu_custom_call.1} parent=27 // pred_check
          %p1067 = pneg %p1066
        $region42: #{tpu_custom_call.1} parent=27 // pred_check_branch
          %1069 = sbr.rel (%p1067) target = $region44
        $region43: #{tpu_custom_call.1} parent=27 // pred_region
          %v1070 = vld [vmem:[#allocation2] sm:$0xff]
          %1071 = vst [vmem:[#allocation10] sm:$0xff] %v1070
        $region44: #{tpu_custom_call.1} parent=27 // pred_fallthru
          _
        // Predicated region
        $region45: #{tpu_custom_call.1} parent=27 // pred_check
          %p1072 = pneg %p104
        $region46: #{tpu_custom_call.1} parent=27 // pred_check_branch
          %1074 = sbr.rel (%p1072) target = $region48
        $region47: #{tpu_custom_call.1} parent=27 // pred_region
          %s1076 = ssub.s32 128, 128
          %1077 = vsyncadd [#allocation7], %s1076
          %s1078 = smul.addr %s27, 128
          %s1079 = scalar_lea.hbm %s3, %s1078
          %s1081 = sshll.u32 [#allocation10], 4
          %s1082 = int_to_ptr.vmem [resolvable:$true] %s1081
          %1084 = dma.vmem_to_hbm [thread:$0]  %s1082, 128, %s1079, [#allocation7]
        $region48: #{tpu_custom_call.1} parent=27 // pred_fallthru
          _
        // Predicated region
        $region49: #{tpu_custom_call.1} parent=27 // pred_check
          %p1085 = pneg %p104
        $region50: #{tpu_custom_call.1} parent=27 // pred_check_branch
          %1087 = sbr.rel (%p1085) target = $region52
        $region51: #{tpu_custom_call.1} parent=27 // pred_region
          %1088 = dma.done [#allocation7], 128
        $region52: #{tpu_custom_call.1} parent=27 // pred_fallthru
          _
      $region28: #{tpu_custom_call.1} parent=5 // pred_fallthru
        _
      %p1089 = scmp.le.s32.totalorder 2, %s18
      // Predicated region
      $region53: #{tpu_custom_call.1} parent=5 // pred_check
        %p1090 = pneg %p1089
      $region54: #{tpu_custom_call.1} parent=5 // pred_check_branch
        %1092 = sbr.rel (%p1090) target = $region56
      $region55: #{tpu_custom_call.1} parent=5 // pred_region
        %s1093 = ssub.s32 %s18, 2
      $region56: #{tpu_custom_call.1} parent=5 // pred_fallthru
        _
    $region6: #{tpu_custom_call.1} parent=1 // loop_footer
      %s22 = sadd.s32 1, %s18
    $region7: #{tpu_custom_call.1} parent=1 // loop_footer_branch
      %17 = sbr.rel target = $region3
    $region8: #{tpu_custom_call.1} parent=1 // loop_exit
      _
    %1094 = vsyncpa [#allocation6], 1
    %s1095 = scalar_lea.sflag [#allocation6], 1
    %1096 = vsyncpa %s1095, 1
    %1097 = vsyncpa [#allocation9], 1
    %1098 = vsyncpa [#allocation7], 1
    %s1099 = scalar_lea.sflag [#allocation7], 1
    %1100 = vsyncpa %s1099, 1

</llo_original>
